<compile_context>
chip_gen: v5e
topology: v5e:2x2
jax: 0.10.0
libtpu: 0.0.40
codegen_flags: <defaults>
</compile_context>

<pallas_src>
import functools

import jax
import jax.numpy as jnp
from jax.experimental import pallas as pl
from jax.experimental.pallas import tpu as pltpu

LANE = 128


def _round_up(v, m):
    return (v + m - 1) // m * m


def _vmem_capacity_bytes():
    """Per-TensorCore physical VMEM (v7x: 64 MiB, v5e/v6e: 128 MiB)."""
    try:
        return int(pltpu.get_tpu_info().vmem_capacity_bytes)
    except Exception:
        kind = jax.devices()[0].device_kind.lower()
        return (64 << 20) if "v7" in kind else (128 << 20)


def _default_row_tile():
    """Row-tile for the tiled path: 256 on 256-wide-MXU chips (v6e/v7x), else 128."""
    kind = jax.devices()[0].device_kind.lower()
    return 256 if ("v6" in kind or "v7" in kind) else 128


def _vmem_limit(resident_bytes):
    cap = _vmem_capacity_bytes()
    return int(min(max(4 * resident_bytes + (8 << 20), 32 << 20), (cap * 3) // 4))


# ----------------------------------------------------------------------------
# Kernels
# ----------------------------------------------------------------------------
def gcn_fused_kernel(a_ref, x_ref, w1_ref, b1_ref, w2_ref, b2_ref, w3_ref,
                     b3_ref, out_ref, *, out_dim):
    """Single-block fused 3-layer GCN. All operands VMEM-resident."""
    a = a_ref[...]                                    # [Np, Np] bf16

    # --- GCNConv 1: transform-first (X @ W1), aggregate, +b1, ReLU ---
    t = jnp.dot(x_ref[...], w1_ref[...], preferred_element_type=jnp.float32)
    h = jnp.dot(a, t.astype(jnp.bfloat16),
                preferred_element_type=jnp.float32) + b1_ref[...]
    h = jnp.maximum(h, 0.0)
    # F.dropout(x, training=False) is the identity at inference time.

    # --- GCNConv 2 ---
    t = jnp.dot(h.astype(jnp.bfloat16), w2_ref[...],
                preferred_element_type=jnp.float32)
    h = jnp.dot(a, t.astype(jnp.bfloat16),
                preferred_element_type=jnp.float32) + b2_ref[...]
    h = jnp.maximum(h, 0.0)

    # --- GCNConv 3 ---
    t = jnp.dot(h.astype(jnp.bfloat16), w3_ref[...],
                preferred_element_type=jnp.float32)
    h = jnp.dot(a, t.astype(jnp.bfloat16),
                preferred_element_type=jnp.float32) + b3_ref[...]

    # --- log_softmax over the logical out_dim columns ---
    col = jax.lax.broadcasted_iota(jnp.int32, h.shape, 1)
    h = jnp.where(col < out_dim, h, -jnp.inf)
    m = jnp.max(h, axis=1, keepdims=True)
    z = h - m
    lse = jnp.log(jnp.sum(jnp.exp(z), axis=1, keepdims=True))  # exp(-inf)=0: no mask
    out_ref[...] = z - lse


def _transform_kernel(h_ref, w_ref, t_ref):
    """Row-tiled feature transform: T[tile] = H[tile] @ W (bf16 out)."""
    t_ref[...] = jnp.dot(h_ref[...], w_ref[...],
                         preferred_element_type=jnp.float32).astype(t_ref.dtype)


def _aggregate_kernel(a_ref, t_ref, b_ref, out_ref, *, activation, out_dim):
    """Row-tiled aggregation: out[tile] = act(A[tile, :] @ T + b)."""
    h = jnp.dot(a_ref[...], t_ref[...],
                preferred_element_type=jnp.float32) + b_ref[...]
    if activation == "relu":
        out_ref[...] = jnp.maximum(h, 0.0).astype(out_ref.dtype)
    else:  # log_softmax over the logical out_dim columns
        col = jax.lax.broadcasted_iota(jnp.int32, h.shape, 1)
        h = jnp.where(col < out_dim, h, -jnp.inf)
        m = jnp.max(h, axis=1, keepdims=True)
        z = h - m
        lse = jnp.log(jnp.sum(jnp.exp(z), axis=1, keepdims=True))
        out_ref[...] = (z - lse).astype(out_ref.dtype)


# ----------------------------------------------------------------------------
# Wrappers
# ----------------------------------------------------------------------------
@functools.partial(jax.jit, static_argnames=("out_dim",))
def gcn_forward_fused(a_hat, x, padded_params, *, out_dim):
    w1p, b1p, w2p, b2p, w3p, b3p = padded_params
    n = x.shape[0]
    n_p = _round_up(max(n, 1), LANE)       # lane/sublane-dense A, MXU-dense K
    f_p = w1p.shape[0]
    o_p = w3p.shape[1]

    a_p = jnp.pad(a_hat, ((0, n_p - n), (0, n_p - n))).astype(jnp.bfloat16)
    x_p = jnp.pad(x, ((0, n_p - n), (0, f_p - x.shape[1]))).astype(jnp.bfloat16)

    resident = (a_p.size * 2 + x_p.size * 2 +
                (w1p.size + w2p.size + w3p.size) * 2 +
                (b1p.size + b2p.size + b3p.size) * 4 +
                n_p * o_p * 4)

    vmem = lambda: pl.BlockSpec(memory_space=pltpu.MemorySpace.VMEM)
    out_p = pl.pallas_call(
        functools.partial(gcn_fused_kernel, out_dim=out_dim),
        out_shape=jax.ShapeDtypeStruct((n_p, o_p), jnp.float32),
        in_specs=[vmem() for _ in range(8)],
        out_specs=vmem(),
        compiler_params=pltpu.CompilerParams(
            vmem_limit_bytes=_vmem_limit(resident)),
    )(a_p, x_p, w1p, b1p, w2p, b2p, w3p, b3p)

    return out_p[:n, :out_dim]


@functools.partial(jax.jit, static_argnames=("out_dim", "row_tile"))
def gcn_forward_tiled(a_hat, x, padded_params, *, out_dim, row_tile=None):
    """Row-tiled path: per-layer transform + aggregate kernels over A row tiles."""
    w1p, b1p, w2p, b2p, w3p, b3p = padded_params
    n = x.shape[0]
    tm = row_tile if row_tile else _default_row_tile()
    n_p = _round_up(max(n, 1), tm)
    f_p = w1p.shape[0]

    a_p = jnp.pad(a_hat, ((0, n_p - n), (0, n_p - n))).astype(jnp.bfloat16)
    x_p = jnp.pad(x, ((0, n_p - n), (0, f_p - x.shape[1]))).astype(jnp.bfloat16)

    # Per-step VMEM: double-buffered (tm, n_p) A slab + full T + weights.
    resident = 2 * tm * n_p * 2 + n_p * LANE * 2 + 3 * LANE * LANE * 2
    vlim = _vmem_limit(resident)
    cparams = pltpu.CompilerParams(dimension_semantics=("parallel",),
                                   vmem_limit_bytes=vlim)

    def transform(h, w):
        n_rows, fin = h.shape
        fout = w.shape[1]
        return pl.pallas_call(
            _transform_kernel,
            out_shape=jax.ShapeDtypeStruct((n_rows, fout), jnp.bfloat16),
            grid=(n_rows // tm,),
            in_specs=[pl.BlockSpec((tm, fin), lambda i: (i, 0)),
                      pl.BlockSpec((fin, fout), lambda i: (0, 0))],
            out_specs=pl.BlockSpec((tm, fout), lambda i: (i, 0)),
            compiler_params=cparams,
        )(h, w)

    def aggregate(t, b, activation, out_dtype):
        fout = t.shape[1]
        return pl.pallas_call(
            functools.partial(_aggregate_kernel, activation=activation,
                              out_dim=out_dim),
            out_shape=jax.ShapeDtypeStruct((n_p, fout), out_dtype),
            grid=(n_p // tm,),
            in_specs=[pl.BlockSpec((tm, n_p), lambda i: (i, 0)),
                      pl.BlockSpec((n_p, fout), lambda i: (0, 0)),
                      pl.BlockSpec((1, fout), lambda i: (0, 0))],
            out_specs=pl.BlockSpec((tm, fout), lambda i: (i, 0)),
            compiler_params=cparams,
        )(a_p, t, b)

    h = aggregate(transform(x_p, w1p), b1p, "relu", jnp.bfloat16)
    h = aggregate(transform(h, w2p), b2p, "relu", jnp.bfloat16)
    out_p = aggregate(transform(h, w3p), b3p, "log_softmax", jnp.float32)
    return out_p[:n, :out_dim]


def gcn_forward(a_hat, x, padded_params, *, out_dim):
    """Dispatch: fused single-block kernel while A_hat fits a fraction of VMEM."""
    n = x.shape[0]
    n_p = _round_up(max(n, 1), LANE)
    fused_bytes = n_p * n_p * 2 + 8 * n_p * LANE * 4   # A + activations/outputs
    if fused_bytes <= _vmem_capacity_bytes() // 4:
        return gcn_forward_fused(a_hat, x, padded_params, out_dim=out_dim)
    return gcn_forward_tiled(a_hat, x, padded_params, out_dim=out_dim)


# ----------------------------------------------------------------------------
# Plain-JAX glue: graph preprocessing, parameter init / padding
# ----------------------------------------------------------------------------
def build_norm_adj(edge_index, num_nodes):
    """Dense GCN-normalized adjacency, matching PyG GCNConv defaults.

    - drops self loops present in the input (reference does
      `edge_index[:, source != target]`)
    - adds self loops with weight 1 (GCNConv add_self_loops=True)
    - symmetric normalization deg^-1/2 (A + I) deg^-1/2.
    """
    src = edge_index[0]
    dst = edge_index[1]
    w = jnp.where(src != dst, 1.0, 0.0).astype(jnp.float32)
    a = jnp.zeros((num_nodes, num_nodes), jnp.float32)
    a = a.at[dst, src].add(w)                       # A[i, j] = 1 iff edge j -> i
    a = a + jnp.eye(num_nodes, dtype=jnp.float32)   # self loops
    deg = jnp.sum(a, axis=1)
    dinv = jnp.where(deg > 0.0, 1.0 / jnp.sqrt(deg), 0.0)
    return a * dinv[:, None] * dinv[None, :]


def glorot(key, fan_in, fan_out):
    lim = jnp.sqrt(6.0 / (fan_in + fan_out))
    return jax.random.uniform(key, (fan_in, fan_out), jnp.float32, -lim, lim)


def init_params(key, input_dim, hidden_dim, output_dim):
    k1, k2, k3 = jax.random.split(key, 3)
    w1 = glorot(k1, input_dim, hidden_dim)
    w2 = glorot(k2, hidden_dim, hidden_dim)
    w3 = glorot(k3, hidden_dim, output_dim)
    b1 = jnp.zeros((1, hidden_dim), jnp.float32)
    b2 = jnp.zeros((1, hidden_dim), jnp.float32)
    b3 = jnp.zeros((1, output_dim), jnp.float32)
    return (w1, b1, w2, b2, w3, b3)


def pad_params(params):
    """Pad to 128-lane multiples and cast once at init (bf16 weights, f32 biases)."""
    w1, b1, w2, b2, w3, b3 = params
    f_p = _round_up(w1.shape[0], LANE)
    h1_p = _round_up(w1.shape[1], LANE)
    h2_p = _round_up(w2.shape[1], LANE)
    o_p = _round_up(w3.shape[1], LANE)

    def pad2(m, rows, cols, dtype):
        return jnp.pad(m, ((0, rows - m.shape[0]),
                           (0, cols - m.shape[1]))).astype(dtype)

    return (pad2(w1, f_p, h1_p, jnp.bfloat16), pad2(b1, 1, h1_p, jnp.float32),
            pad2(w2, h1_p, h2_p, jnp.bfloat16), pad2(b2, 1, h2_p, jnp.float32),
            pad2(w3, h2_p, o_p, jnp.bfloat16), pad2(b3, 1, o_p, jnp.float32))


if __name__ == "__main__":
    key = jax.random.PRNGKey(0)
    k_text, k_img, k_params, k_big = jax.random.split(key, 4)

    # Synthetic stand-ins for the dataset-derived tensors:
    #   X_text: [N, 32] text features; image_metadata: [N, 2] (width, height).
    num_nodes = 8
    text_dim = 32
    hidden_dim = 64
    output_dim = 2

    X_text = jax.random.normal(k_text, (num_nodes, text_dim), jnp.float32)
    image_metadata = jnp.abs(
        jax.random.normal(k_img, (num_nodes, 2), jnp.float32)) * 100.0
    x = jnp.concatenate([X_text, image_metadata], axis=1)   # [8, 34]
    input_dim = x.shape[1]

    # Small directed edge list; includes one self loop (1 -> 1) that the
    # preprocessing / normalization removes, as in the reference code.
    edge_index = jnp.array(
        [[0, 1, 2, 3, 4, 5, 6, 7, 0, 2, 1],
         [1, 2, 3, 4, 5, 6, 7, 0, 2, 5, 1]], dtype=jnp.int32)

    a_hat = build_norm_adj(edge_index, num_nodes)
    params = init_params(k_params, input_dim, hidden_dim, output_dim)
    padded_params = pad_params(params)   # pad + cast ONCE at init time

    out = gcn_forward(a_hat, x, padded_params, out_dim=output_dim)
    jax.block_until_ready(out)
    assert out.shape == (num_nodes, output_dim)
    # rows of exp(log_softmax) must sum to 1
    assert bool(jnp.allclose(jnp.sum(jnp.exp(out), axis=1), 1.0, atol=1e-4))

    # Exercise the row-tiled ("parallel" grid) path on a larger synthetic graph
    # and cross-check it against the fused single-block kernel.
    n_big = 300
    kb1, kb2 = jax.random.split(k_big)
    x_big = jax.random.normal(kb1, (n_big, input_dim), jnp.float32)
    e_big = jax.random.randint(kb2, (2, 4 * n_big), 0, n_big, dtype=jnp.int32)
    a_big = build_norm_adj(e_big, n_big)
    out_fused = gcn_forward_fused(a_big, x_big, padded_params, out_dim=output_dim)
    out_tiled = gcn_forward_tiled(a_big, x_big, padded_params, out_dim=output_dim)
    jax.block_until_ready((out_fused, out_tiled))
    assert out_fused.shape == (n_big, output_dim)
    assert out_tiled.shape == (n_big, output_dim)
    assert bool(jnp.allclose(jnp.sum(jnp.exp(out_tiled), axis=1), 1.0, atol=1e-4))
    assert bool(jnp.allclose(out_fused, out_tiled, atol=5e-2, rtol=5e-2))

    print("KERNEL_OK")
</pallas_src>

<mosaic_0001>
module attributes {stable_mosaic.version = 11 : i64} {
  func.func @gcn_fused_kernel(%arg0: memref<128x128xbf16, #tpu.memory_space<vmem>>, %arg1: memref<128x128xbf16, #tpu.memory_space<vmem>>, %arg2: memref<128x128xbf16, #tpu.memory_space<vmem>>, %arg3: memref<1x128xf32, #tpu.memory_space<vmem>>, %arg4: memref<128x128xbf16, #tpu.memory_space<vmem>>, %arg5: memref<1x128xf32, #tpu.memory_space<vmem>>, %arg6: memref<128x128xbf16, #tpu.memory_space<vmem>>, %arg7: memref<1x128xf32, #tpu.memory_space<vmem>>, %arg8: memref<128x128xf32, #tpu.memory_space<vmem>>) attributes {dimension_semantics = [], scalar_prefetch = 0 : i64, scratch_operands = 0 : i64, tpu.core_type = #tpu.core_type<tc>} {
    %c0 = arith.constant 0 : index
    %c0_0 = arith.constant 0 : index
    %0 = vector.load %arg0[%c0, %c0_0] : memref<128x128xbf16, #tpu.memory_space<vmem>>, vector<128x128xbf16>
    %c0_1 = arith.constant 0 : index
    %c0_2 = arith.constant 0 : index
    %1 = vector.load %arg1[%c0_1, %c0_2] : memref<128x128xbf16, #tpu.memory_space<vmem>>, vector<128x128xbf16>
    %c0_3 = arith.constant 0 : index
    %c0_4 = arith.constant 0 : index
    %2 = vector.load %arg2[%c0_3, %c0_4] : memref<128x128xbf16, #tpu.memory_space<vmem>>, vector<128x128xbf16>
    %cst = arith.constant dense<0.000000e+00> : vector<128x128xf32>
    %3 = tpu.matmul %1, %2, %cst {dimension_numbers = #tpu.dot_dimension_numbers<[1], [0], [0], [1], [0, 0, 1, 1], [], []>} : vector<128x128xbf16>, vector<128x128xbf16>, vector<128x128xf32> -> vector<128x128xf32>
    %4 = arith.truncf %3 : vector<128x128xf32> to vector<128x128xbf16>
    %cst_5 = arith.constant dense<0.000000e+00> : vector<128x128xf32>
    %5 = tpu.matmul %0, %4, %cst_5 {dimension_numbers = #tpu.dot_dimension_numbers<[1], [0], [0], [1], [0, 0, 1, 1], [], []>} : vector<128x128xbf16>, vector<128x128xbf16>, vector<128x128xf32> -> vector<128x128xf32>
    %c0_6 = arith.constant 0 : index
    %c0_7 = arith.constant 0 : index
    %6 = vector.load %arg3[%c0_6, %c0_7] : memref<1x128xf32, #tpu.memory_space<vmem>>, vector<1x128xf32>
    %7 = vector.broadcast %6 : vector<1x128xf32> to vector<128x128xf32>
    %8 = arith.addf %5, %7 : vector<128x128xf32>
    %cst_8 = arith.constant 0.000000e+00 : f32
    %9 = vector.broadcast %cst_8 : f32 to vector<128x128xf32>
    %10 = arith.maximumf %8, %9 : vector<128x128xf32>
    %11 = arith.truncf %10 : vector<128x128xf32> to vector<128x128xbf16>
    %c0_9 = arith.constant 0 : index
    %c0_10 = arith.constant 0 : index
    %12 = vector.load %arg4[%c0_9, %c0_10] : memref<128x128xbf16, #tpu.memory_space<vmem>>, vector<128x128xbf16>
    %cst_11 = arith.constant dense<0.000000e+00> : vector<128x128xf32>
    %13 = tpu.matmul %11, %12, %cst_11 {dimension_numbers = #tpu.dot_dimension_numbers<[1], [0], [0], [1], [0, 0, 1, 1], [], []>} : vector<128x128xbf16>, vector<128x128xbf16>, vector<128x128xf32> -> vector<128x128xf32>
    %14 = arith.truncf %13 : vector<128x128xf32> to vector<128x128xbf16>
    %cst_12 = arith.constant dense<0.000000e+00> : vector<128x128xf32>
    %15 = tpu.matmul %0, %14, %cst_12 {dimension_numbers = #tpu.dot_dimension_numbers<[1], [0], [0], [1], [0, 0, 1, 1], [], []>} : vector<128x128xbf16>, vector<128x128xbf16>, vector<128x128xf32> -> vector<128x128xf32>
    %c0_13 = arith.constant 0 : index
    %c0_14 = arith.constant 0 : index
    %16 = vector.load %arg5[%c0_13, %c0_14] : memref<1x128xf32, #tpu.memory_space<vmem>>, vector<1x128xf32>
    %17 = vector.broadcast %16 : vector<1x128xf32> to vector<128x128xf32>
    %18 = arith.addf %15, %17 : vector<128x128xf32>
    %cst_15 = arith.constant 0.000000e+00 : f32
    %19 = vector.broadcast %cst_15 : f32 to vector<128x128xf32>
    %20 = arith.maximumf %18, %19 : vector<128x128xf32>
    %21 = arith.truncf %20 : vector<128x128xf32> to vector<128x128xbf16>
    %c0_16 = arith.constant 0 : index
    %c0_17 = arith.constant 0 : index
    %22 = vector.load %arg6[%c0_16, %c0_17] : memref<128x128xbf16, #tpu.memory_space<vmem>>, vector<128x128xbf16>
    %cst_18 = arith.constant dense<0.000000e+00> : vector<128x128xf32>
    %23 = tpu.matmul %21, %22, %cst_18 {dimension_numbers = #tpu.dot_dimension_numbers<[1], [0], [0], [1], [0, 0, 1, 1], [], []>} : vector<128x128xbf16>, vector<128x128xbf16>, vector<128x128xf32> -> vector<128x128xf32>
    %24 = arith.truncf %23 : vector<128x128xf32> to vector<128x128xbf16>
    %cst_19 = arith.constant dense<0.000000e+00> : vector<128x128xf32>
    %25 = tpu.matmul %0, %24, %cst_19 {dimension_numbers = #tpu.dot_dimension_numbers<[1], [0], [0], [1], [0, 0, 1, 1], [], []>} : vector<128x128xbf16>, vector<128x128xbf16>, vector<128x128xf32> -> vector<128x128xf32>
    %c0_20 = arith.constant 0 : index
    %c0_21 = arith.constant 0 : index
    %26 = vector.load %arg7[%c0_20, %c0_21] : memref<1x128xf32, #tpu.memory_space<vmem>>, vector<1x128xf32>
    %27 = vector.broadcast %26 : vector<1x128xf32> to vector<128x128xf32>
    %28 = arith.addf %25, %27 : vector<128x128xf32>
    %29 = tpu.iota {dimensions = array<i32: 1>} : vector<128x128xi32>
    %c2_i32 = arith.constant 2 : i32
    %30 = vector.broadcast %c2_i32 : i32 to vector<128x128xi32>
    %31 = arith.cmpi slt, %29, %30 : vector<128x128xi32>
    %cst_22 = arith.constant 0xFF800000 : f32
    %32 = vector.broadcast %cst_22 : f32 to vector<128x128xf32>
    %33 = arith.select %31, %28, %32 : vector<128x128xi1>, vector<128x128xf32>
    %cst_23 = arith.constant dense<0xFF800000> : vector<128xf32>
    %34 = vector.multi_reduction <maximumf>, %33, %cst_23 [1] : vector<128x128xf32> to vector<128xf32>
    %35 = vector.shape_cast %34 : vector<128xf32> to vector<128x1xf32>
    %36 = vector.broadcast %35 : vector<128x1xf32> to vector<128x128xf32>
    %37 = arith.subf %33, %36 : vector<128x128xf32>
    %38 = math.exp %37 : vector<128x128xf32>
    %cst_24 = arith.constant dense<0.000000e+00> : vector<128xf32>
    %39 = vector.multi_reduction <add>, %38, %cst_24 [1] : vector<128x128xf32> to vector<128xf32>
    %40 = vector.shape_cast %39 : vector<128xf32> to vector<128x1xf32>
    %41 = math.log %40 : vector<128x1xf32>
    %42 = vector.broadcast %41 : vector<128x1xf32> to vector<128x128xf32>
    %43 = arith.subf %37, %42 : vector<128x128xf32>
    %c0_25 = arith.constant 0 : index
    %c0_26 = arith.constant 0 : index
    %44 = vector.load %arg8[%c0_25, %c0_26] : memref<128x128xf32, #tpu.memory_space<vmem>>, vector<128x128xf32>
    tpu.vector_store %arg8[%c0_25, %c0_26], %43 {strides = array<i32>} : memref<128x128xf32, #tpu.memory_space<vmem>>, vector<128x128xf32>,
    return
  }
}

</mosaic_0001>

<llo_original>
// kernel: gcn_forward_fused.1
$region0: #{gcn_forward_fused.1}
  #allocation0 [shape = 'u32[]', space=smem, size = 0x4, offset = 0x4, fixed_abs, tag = 'smem constant byte address 0x4 - core index']
  #allocation1 [shape = 'u32[72,128]{1,0:T(1,128)}', space=vmem, size = 0x9000, scoped, tag = 'internal scratch']
  %s0 = inlined_call_operand.vmem [shape: bf16[128,128], index: 0, kind: input, shape index: {}]
  %s1 = inlined_call_operand.vmem [shape: bf16[128,128], index: 1, kind: input, shape index: {}]
  %s2 = inlined_call_operand.vmem [shape: bf16[128,128], index: 2, kind: input, shape index: {}]
  %s3 = inlined_call_operand.vmem [shape: f32[1,128], index: 3, kind: input, shape index: {}]
  %s4 = inlined_call_operand.vmem [shape: bf16[128,128], index: 4, kind: input, shape index: {}]
  %s5 = inlined_call_operand.vmem [shape: f32[1,128], index: 5, kind: input, shape index: {}]
  %s6 = inlined_call_operand.hbm [shape: bf16[128,128], index: 6, kind: input, shape index: {}]
  %s7 = inlined_call_operand.vmem [shape: f32[1,128], index: 7, kind: input, shape index: {}]
  %s8 = inlined_call_operand.vmem [shape: f32[128,128], index: 8, kind: output, shape index: {}]
  %s9 = sld [smem:[#allocation0]]
  $region46: #{gcn_forward_fused.1} parent=0
    _
  %s11 = ssub.s32 1, %s9
  %s12 = scalar_select 0, %s11, %s9
  $region1: #{gcn_forward_fused.1} parent=0
    #allocation2 [shape = 'u8[32768]{0}', space=vmem, size = 0x8000, scoped, tag = 'input window, operand 6, single buffered']
    #allocation3 [shape = 's32[1]{0}', space=sflag, size = 0x4, scoped, tag = 'scoped memory for gcn_forward_fused.1']
    %13 = vsyncpa [#allocation3], 0
    // Predicated region
    $region2: #{gcn_forward_fused.1} parent=1 // pred_check
      _
    $region3: #{gcn_forward_fused.1} parent=1 // pred_check_branch
      %15 = sbr.rel (0) target = $region5
    $region4: #{gcn_forward_fused.1} parent=1 // pred_region
      _
    $region5: #{gcn_forward_fused.1} parent=1 // pred_fallthru
      _
    // Predicated region
    $region6: #{gcn_forward_fused.1} parent=1 // pred_check
      _
    $region7: #{gcn_forward_fused.1} parent=1 // pred_check_branch
      %17 = sbr.rel (0) target = $region9
    $region8: #{gcn_forward_fused.1} parent=1 // pred_region
      _
    $region9: #{gcn_forward_fused.1} parent=1 // pred_fallthru
      _
    // Predicated region
    $region10: #{gcn_forward_fused.1} parent=1 // pred_check
      _
    $region11: #{gcn_forward_fused.1} parent=1 // pred_check_branch
      %19 = sbr.rel (0) target = $region13
    $region12: #{gcn_forward_fused.1} parent=1 // pred_region
      _
    $region13: #{gcn_forward_fused.1} parent=1 // pred_fallthru
      _
    // Predicated region
    $region14: #{gcn_forward_fused.1} parent=1 // pred_check
      _
    $region15: #{gcn_forward_fused.1} parent=1 // pred_check_branch
      %21 = sbr.rel (0) target = $region17
    $region16: #{gcn_forward_fused.1} parent=1 // pred_region
      _
    $region17: #{gcn_forward_fused.1} parent=1 // pred_fallthru
      _
    // Predicated region
    $region18: #{gcn_forward_fused.1} parent=1 // pred_check
      _
    $region19: #{gcn_forward_fused.1} parent=1 // pred_check_branch
      %23 = sbr.rel (0) target = $region21
    $region20: #{gcn_forward_fused.1} parent=1 // pred_region
      _
    $region21: #{gcn_forward_fused.1} parent=1 // pred_fallthru
      _
    // Predicated region
    $region22: #{gcn_forward_fused.1} parent=1 // pred_check
      _
    $region23: #{gcn_forward_fused.1} parent=1 // pred_check_branch
      %25 = sbr.rel (0) target = $region25
    $region24: #{gcn_forward_fused.1} parent=1 // pred_region
      _
    $region25: #{gcn_forward_fused.1} parent=1 // pred_fallthru
      _
    // Predicated region
    $region26: #{gcn_forward_fused.1} parent=1 // pred_check
      _
    $region27: #{gcn_forward_fused.1} parent=1 // pred_check_branch
      %27 = sbr.rel (0) target = $region29
    $region28: #{gcn_forward_fused.1} parent=1 // pred_region
      %29 = vsyncadd [#allocation3], 0
      %s30 = sshll.u32 %s6, 4
      %s31 = int_to_ptr.hbm [resolvable:$true] %s30
      %s32 = sshll.u32 [#allocation2], 4
      %s33 = int_to_ptr.vmem [resolvable:$true] %s32
      %38 = dma.hbm_to_vmem [thread:$0]  %s31, 1024, %s33, [#allocation3], 64, 64, 4
    $region29: #{gcn_forward_fused.1} parent=1 // pred_fallthru
      _
    // Predicated region
    $region30: #{gcn_forward_fused.1} parent=1 // pred_check
      _
    $region31: #{gcn_forward_fused.1} parent=1 // pred_check_branch
      %40 = sbr.rel (0) target = $region33
    $region32: #{gcn_forward_fused.1} parent=1 // pred_region
      _
    $region33: #{gcn_forward_fused.1} parent=1 // pred_fallthru
      _
    // Predicated region
    $region34: #{gcn_forward_fused.1} parent=1 // pred_check
      _
    $region35: #{gcn_forward_fused.1} parent=1 // pred_check_branch
      %42 = sbr.rel (0) target = $region37
    $region36: #{gcn_forward_fused.1} parent=1 // pred_region
      %44 = dma.done [#allocation3], 1024
    $region37: #{gcn_forward_fused.1} parent=1 // pred_fallthru
      _
    %v45 = vld [vmem:[%s0] sm:$0xf]
    %v46 = vld [vmem:[%s0 + $0x4] sm:$0xf]
    %v47 = vld [vmem:[%s0 + $0x8] sm:$0xf]
    %v48 = vld [vmem:[%s0 + $0xc] sm:$0xf]
    %v49 = vld [vmem:[%s0 + $0x10] sm:$0xf]
    %v50 = vld [vmem:[%s0 + $0x14] sm:$0xf]
    %v51 = vld [vmem:[%s0 + $0x18] sm:$0xf]
    %v52 = vld [vmem:[%s0 + $0x1c] sm:$0xf]
    %v53 = vld [vmem:[%s0 + $0x20] sm:$0xf]
    %v54 = vld [vmem:[%s0 + $0x24] sm:$0xf]
    %v55 = vld [vmem:[%s0 + $0x28] sm:$0xf]
    %v56 = vld [vmem:[%s0 + $0x2c] sm:$0xf]
    %v57 = vld [vmem:[%s0 + $0x30] sm:$0xf]
    %v58 = vld [vmem:[%s0 + $0x34] sm:$0xf]
    %v59 = vld [vmem:[%s0 + $0x38] sm:$0xf]
    %v60 = vld [vmem:[%s0 + $0x3c] sm:$0xf]
    %v61 = vld [vmem:[%s1] sm:$0xf]
    %v62 = vld [vmem:[%s1 + $0x4] sm:$0xf]
    %v63 = vld [vmem:[%s1 + $0x8] sm:$0xf]
    %v64 = vld [vmem:[%s1 + $0xc] sm:$0xf]
    %v65 = vld [vmem:[%s1 + $0x10] sm:$0xf]
    %v66 = vld [vmem:[%s1 + $0x14] sm:$0xf]
    %v67 = vld [vmem:[%s1 + $0x18] sm:$0xf]
    %v68 = vld [vmem:[%s1 + $0x1c] sm:$0xf]
    %v69 = vld [vmem:[%s1 + $0x20] sm:$0xf]
    %v70 = vld [vmem:[%s1 + $0x24] sm:$0xf]
    %v71 = vld [vmem:[%s1 + $0x28] sm:$0xf]
    %v72 = vld [vmem:[%s1 + $0x2c] sm:$0xf]
    %v73 = vld [vmem:[%s1 + $0x30] sm:$0xf]
    %v74 = vld [vmem:[%s1 + $0x34] sm:$0xf]
    %v75 = vld [vmem:[%s1 + $0x38] sm:$0xf]
    %v76 = vld [vmem:[%s1 + $0x3c] sm:$0xf]
    %v77 = vld [vmem:[%s2] sm:$0xf]
    %v78 = vld [vmem:[%s2 + $0x4] sm:$0xf]
    %v79 = vld [vmem:[%s2 + $0x8] sm:$0xf]
    %v80 = vld [vmem:[%s2 + $0xc] sm:$0xf]
    %v81 = vld [vmem:[%s2 + $0x10] sm:$0xf]
    %v82 = vld [vmem:[%s2 + $0x14] sm:$0xf]
    %v83 = vld [vmem:[%s2 + $0x18] sm:$0xf]
    %v84 = vld [vmem:[%s2 + $0x1c] sm:$0xf]
    %v85 = vld [vmem:[%s2 + $0x20] sm:$0xf]
    %v86 = vld [vmem:[%s2 + $0x24] sm:$0xf]
    %v87 = vld [vmem:[%s2 + $0x28] sm:$0xf]
    %v88 = vld [vmem:[%s2 + $0x2c] sm:$0xf]
    %v89 = vld [vmem:[%s2 + $0x30] sm:$0xf]
    %v90 = vld [vmem:[%s2 + $0x34] sm:$0xf]
    %v91 = vld [vmem:[%s2 + $0x38] sm:$0xf]
    %v92 = vld [vmem:[%s2 + $0x3c] sm:$0xf]
    %v109 = vunpack.c.l.b16 %v61
    %v110 = vunpack.c.l.b16 %v62
    %v111 = vunpack.c.l.b16 %v63
    %v112 = vunpack.c.l.b16 %v64
    %v113 = vunpack.c.l.b16 %v65
    %v114 = vunpack.c.l.b16 %v66
    %v115 = vunpack.c.l.b16 %v67
    %v116 = vunpack.c.l.b16 %v68
    %v117 = vunpack.c.l.b16 %v69
    %v118 = vunpack.c.l.b16 %v70
    %v119 = vunpack.c.l.b16 %v71
    %v120 = vunpack.c.l.b16 %v72
    %v121 = vunpack.c.l.b16 %v73
    %v122 = vunpack.c.l.b16 %v74
    %v123 = vunpack.c.l.b16 %v75
    %v124 = vunpack.c.l.b16 %v76
    %v125 = vpack.c.b16 %v110, %v109
    %v126 = vpack.c.b16 %v112, %v111
    %v127 = vpack.c.b16 %v114, %v113
    %v128 = vpack.c.b16 %v116, %v115
    %v129 = vpack.c.b16 %v118, %v117
    %v130 = vpack.c.b16 %v120, %v119
    %v131 = vpack.c.b16 %v122, %v121
    %v132 = vpack.c.b16 %v124, %v123
    %v157 = vunpack.c.l.b16 %v77
    %v158 = vunpack.c.l.b16 %v78
    %v159 = vunpack.c.l.b16 %v79
    %v160 = vunpack.c.l.b16 %v80
    %v161 = vunpack.c.l.b16 %v81
    %v162 = vunpack.c.l.b16 %v82
    %v163 = vunpack.c.l.b16 %v83
    %v164 = vunpack.c.l.b16 %v84
    %v165 = vunpack.c.l.b16 %v85
    %v166 = vunpack.c.l.b16 %v86
    %v167 = vunpack.c.l.b16 %v87
    %v168 = vunpack.c.l.b16 %v88
    %v169 = vunpack.c.l.b16 %v89
    %v170 = vunpack.c.l.b16 %v90
    %v171 = vunpack.c.l.b16 %v91
    %v172 = vunpack.c.l.b16 %v92
    %v173 = vpack.c.b16 %v158, %v157
    %v174 = vpack.c.b16 %v160, %v159
    %v175 = vpack.c.b16 %v162, %v161
    %v176 = vpack.c.b16 %v164, %v163
    %v177 = vpack.c.b16 %v166, %v165
    %v178 = vpack.c.b16 %v168, %v167
    %v179 = vpack.c.b16 %v170, %v169
    %v180 = vpack.c.b16 %v172, %v171
    %189 = vmatpush.bf16.msra.mxu0 %v180
    %190 = vmatpush.bf16.msra.mxu0 %v179
    %191 = vmatpush.bf16.msra.mxu0 %v178
    %192 = vmatpush.bf16.msra.mxu0 %v177
    %193 = vmatpush.bf16.msra.mxu0 %v176
    %194 = vmatpush.bf16.msra.mxu0 %v175
    %195 = vmatpush.bf16.msra.mxu0 %v174
    %196 = vmatpush.bf16.msra.mxu0 %v173
    %197 = vmatmul.bf16.gmra.mxu0 %v125
    %v198 = vpop.f32.mrf.mxu0
    %v199 = vadd.f32 0.0, %v198
    %v200 = vpop.f32.mrf.mxu0
    %v201 = vadd.f32 0.0, %v200
    %202 = vmatmul.bf16.gmra.mxu0 %v126
    %v203 = vpop.f32.mrf.mxu0
    %v204 = vadd.f32 0.0, %v203
    %v205 = vpop.f32.mrf.mxu0
    %v206 = vadd.f32 0.0, %v205
    %207 = vmatmul.bf16.gmra.mxu0 %v127
    %v208 = vpop.f32.mrf.mxu0
    %v209 = vadd.f32 0.0, %v208
    %v210 = vpop.f32.mrf.mxu0
    %v211 = vadd.f32 0.0, %v210
    %212 = vmatmul.bf16.gmra.mxu0 %v128
    %v213 = vpop.f32.mrf.mxu0
    %v214 = vadd.f32 0.0, %v213
    %v215 = vpop.f32.mrf.mxu0
    %v216 = vadd.f32 0.0, %v215
    %217 = vmatmul.bf16.gmra.mxu0 %v129
    %v218 = vpop.f32.mrf.mxu0
    %v219 = vadd.f32 0.0, %v218
    %v220 = vpop.f32.mrf.mxu0
    %v221 = vadd.f32 0.0, %v220
    %222 = vmatmul.bf16.gmra.mxu0 %v130
    %v223 = vpop.f32.mrf.mxu0
    %v224 = vadd.f32 0.0, %v223
    %v225 = vpop.f32.mrf.mxu0
    %v226 = vadd.f32 0.0, %v225
    %227 = vmatmul.bf16.gmra.mxu0 %v131
    %v228 = vpop.f32.mrf.mxu0
    %v229 = vadd.f32 0.0, %v228
    %v230 = vpop.f32.mrf.mxu0
    %v231 = vadd.f32 0.0, %v230
    %232 = vmatmul.bf16.gmra.mxu0 %v132
    %v233 = vpop.f32.mrf.mxu0
    %v234 = vadd.f32 0.0, %v233
    %v235 = vpop.f32.mrf.mxu0
    %v236 = vadd.f32 0.0, %v235
    %237 = vdwg.mxu0
    %v238 = vpack.c.bf16 %v201, %v199
    %v239 = vpack.c.bf16 %v206, %v204
    %v240 = vpack.c.bf16 %v211, %v209
    %v241 = vpack.c.bf16 %v216, %v214
    %v242 = vpack.c.bf16 %v221, %v219
    %v243 = vpack.c.bf16 %v226, %v224
    %v244 = vpack.c.bf16 %v231, %v229
    %v245 = vpack.c.bf16 %v236, %v234
    %v246 = vld [vmem:[%s3] sm:$0x1]
    %v248 = vperm.slane %v246, 0
    %v266 = vunpack.c.l.b16 %v45
    %v267 = vunpack.c.l.b16 %v46
    %v268 = vunpack.c.l.b16 %v47
    %v269 = vunpack.c.l.b16 %v48
    %v270 = vunpack.c.l.b16 %v49
    %v271 = vunpack.c.l.b16 %v50
    %v272 = vunpack.c.l.b16 %v51
    %v273 = vunpack.c.l.b16 %v52
    %v274 = vunpack.c.l.b16 %v53
    %v275 = vunpack.c.l.b16 %v54
    %v276 = vunpack.c.l.b16 %v55
    %v277 = vunpack.c.l.b16 %v56
    %v278 = vunpack.c.l.b16 %v57
    %v279 = vunpack.c.l.b16 %v58
    %v280 = vunpack.c.l.b16 %v59
    %v281 = vunpack.c.l.b16 %v60
    %v282 = vpack.c.b16 %v267, %v266
    %v283 = vpack.c.b16 %v269, %v268
    %v284 = vpack.c.b16 %v271, %v270
    %v285 = vpack.c.b16 %v273, %v272
    %v286 = vpack.c.b16 %v275, %v274
    %v287 = vpack.c.b16 %v277, %v276
    %v288 = vpack.c.b16 %v279, %v278
    %v289 = vpack.c.b16 %v281, %v280
    %298 = vmatpush.bf16.msra.mxu0 %v245
    %299 = vmatpush.bf16.msra.mxu0 %v244
    %300 = vmatpush.bf16.msra.mxu0 %v243
    %301 = vmatpush.bf16.msra.mxu0 %v242
    %302 = vmatpush.bf16.msra.mxu0 %v241
    %303 = vmatpush.bf16.msra.mxu0 %v240
    %304 = vmatpush.bf16.msra.mxu0 %v239
    %305 = vmatpush.bf16.msra.mxu0 %v238
    %306 = vmatmul.bf16.gmra.mxu0 %v282
    %v307 = vpop.f32.mrf.mxu0
    %v308 = vadd.f32 %v248, %v307
    %v309 = vpop.f32.mrf.mxu0
    %v310 = vadd.f32 %v248, %v309
    %311 = vmatmul.bf16.gmra.mxu0 %v283
    %v312 = vpop.f32.mrf.mxu0
    %v313 = vadd.f32 %v248, %v312
    %v314 = vpop.f32.mrf.mxu0
    %v315 = vadd.f32 %v248, %v314
    %316 = vmatmul.bf16.gmra.mxu0 %v284
    %v317 = vpop.f32.mrf.mxu0
    %v318 = vadd.f32 %v248, %v317
    %v319 = vpop.f32.mrf.mxu0
    %v320 = vadd.f32 %v248, %v319
    %321 = vmatmul.bf16.gmra.mxu0 %v285
    %v322 = vpop.f32.mrf.mxu0
    %v323 = vadd.f32 %v248, %v322
    %v324 = vpop.f32.mrf.mxu0
    %v325 = vadd.f32 %v248, %v324
    %326 = vmatmul.bf16.gmra.mxu0 %v286
    %v327 = vpop.f32.mrf.mxu0
    %v328 = vadd.f32 %v248, %v327
    %v329 = vpop.f32.mrf.mxu0
    %v330 = vadd.f32 %v248, %v329
    %331 = vmatmul.bf16.gmra.mxu0 %v287
    %v332 = vpop.f32.mrf.mxu0
    %v333 = vadd.f32 %v248, %v332
    %v334 = vpop.f32.mrf.mxu0
    %v335 = vadd.f32 %v248, %v334
    %336 = vmatmul.bf16.gmra.mxu0 %v288
    %v337 = vpop.f32.mrf.mxu0
    %v338 = vadd.f32 %v248, %v337
    %v339 = vpop.f32.mrf.mxu0
    %v340 = vadd.f32 %v248, %v339
    %341 = vmatmul.bf16.gmra.mxu0 %v289
    %v342 = vpop.f32.mrf.mxu0
    %v343 = vadd.f32 %v248, %v342
    %v344 = vpop.f32.mrf.mxu0
    %v345 = vadd.f32 %v248, %v344
    %346 = vdwg.mxu0
    %v347 = vmax.f32 %v308, 0.0
    %v348 = vmax.f32 %v310, 0.0
    %v349 = vmax.f32 %v313, 0.0
    %v350 = vmax.f32 %v315, 0.0
    %v351 = vmax.f32 %v318, 0.0
    %v352 = vmax.f32 %v320, 0.0
    %v353 = vmax.f32 %v323, 0.0
    %v354 = vmax.f32 %v325, 0.0
    %v355 = vmax.f32 %v328, 0.0
    %v356 = vmax.f32 %v330, 0.0
    %v357 = vmax.f32 %v333, 0.0
    %v358 = vmax.f32 %v335, 0.0
    %v359 = vmax.f32 %v338, 0.0
    %v360 = vmax.f32 %v340, 0.0
    %v361 = vmax.f32 %v343, 0.0
    %v362 = vmax.f32 %v345, 0.0
    %v363 = vpack.c.bf16 %v348, %v347
    %v364 = vpack.c.bf16 %v350, %v349
    %v365 = vpack.c.bf16 %v352, %v351
    %v366 = vpack.c.bf16 %v354, %v353
    %v367 = vpack.c.bf16 %v356, %v355
    %v368 = vpack.c.bf16 %v358, %v357
    %v369 = vpack.c.bf16 %v360, %v359
    %v370 = vpack.c.bf16 %v362, %v361
    %v371 = vld [vmem:[%s4] sm:$0xf]
    %v372 = vld [vmem:[%s4 + $0x4] sm:$0xf]
    %v373 = vld [vmem:[%s4 + $0x8] sm:$0xf]
    %v374 = vld [vmem:[%s4 + $0xc] sm:$0xf]
    %v375 = vld [vmem:[%s4 + $0x10] sm:$0xf]
    %v376 = vld [vmem:[%s4 + $0x14] sm:$0xf]
    %v377 = vld [vmem:[%s4 + $0x18] sm:$0xf]
    %v378 = vld [vmem:[%s4 + $0x1c] sm:$0xf]
    %v379 = vld [vmem:[%s4 + $0x20] sm:$0xf]
    %v380 = vld [vmem:[%s4 + $0x24] sm:$0xf]
    %v381 = vld [vmem:[%s4 + $0x28] sm:$0xf]
    %v382 = vld [vmem:[%s4 + $0x2c] sm:$0xf]
    %v383 = vld [vmem:[%s4 + $0x30] sm:$0xf]
    %v384 = vld [vmem:[%s4 + $0x34] sm:$0xf]
    %v385 = vld [vmem:[%s4 + $0x38] sm:$0xf]
    %v386 = vld [vmem:[%s4 + $0x3c] sm:$0xf]
    %v403 = vunpack.c.l.b16 %v371
    %v404 = vunpack.c.l.b16 %v372
    %v405 = vunpack.c.l.b16 %v373
    %v406 = vunpack.c.l.b16 %v374
    %v407 = vunpack.c.l.b16 %v375
    %v408 = vunpack.c.l.b16 %v376
    %v409 = vunpack.c.l.b16 %v377
    %v410 = vunpack.c.l.b16 %v378
    %v411 = vunpack.c.l.b16 %v379
    %v412 = vunpack.c.l.b16 %v380
    %v413 = vunpack.c.l.b16 %v381
    %v414 = vunpack.c.l.b16 %v382
    %v415 = vunpack.c.l.b16 %v383
    %v416 = vunpack.c.l.b16 %v384
    %v417 = vunpack.c.l.b16 %v385
    %v418 = vunpack.c.l.b16 %v386
    %v419 = vpack.c.b16 %v404, %v403
    %v420 = vpack.c.b16 %v406, %v405
    %v421 = vpack.c.b16 %v408, %v407
    %v422 = vpack.c.b16 %v410, %v409
    %v423 = vpack.c.b16 %v412, %v411
    %v424 = vpack.c.b16 %v414, %v413
    %v425 = vpack.c.b16 %v416, %v415
    %v426 = vpack.c.b16 %v418, %v417
    %435 = vmatpush.bf16.msra.mxu0 %v426
    %436 = vmatpush.bf16.msra.mxu0 %v425
    %437 = vmatpush.bf16.msra.mxu0 %v424
    %438 = vmatpush.bf16.msra.mxu0 %v423
    %439 = vmatpush.bf16.msra.mxu0 %v422
    %440 = vmatpush.bf16.msra.mxu0 %v421
    %441 = vmatpush.bf16.msra.mxu0 %v420
    %442 = vmatpush.bf16.msra.mxu0 %v419
    %443 = vmatmul.bf16.gmra.mxu0 %v363
    %v444 = vpop.f32.mrf.mxu0
    %v445 = vadd.f32 0.0, %v444
    %v446 = vpop.f32.mrf.mxu0
    %v447 = vadd.f32 0.0, %v446
    %448 = vmatmul.bf16.gmra.mxu0 %v364
    %v449 = vpop.f32.mrf.mxu0
    %v450 = vadd.f32 0.0, %v449
    %v451 = vpop.f32.mrf.mxu0
    %v452 = vadd.f32 0.0, %v451
    %453 = vmatmul.bf16.gmra.mxu0 %v365
    %v454 = vpop.f32.mrf.mxu0
    %v455 = vadd.f32 0.0, %v454
    %v456 = vpop.f32.mrf.mxu0
    %v457 = vadd.f32 0.0, %v456
    %458 = vmatmul.bf16.gmra.mxu0 %v366
    %v459 = vpop.f32.mrf.mxu0
    %v460 = vadd.f32 0.0, %v459
    %v461 = vpop.f32.mrf.mxu0
    %v462 = vadd.f32 0.0, %v461
    %463 = vmatmul.bf16.gmra.mxu0 %v367
    %v464 = vpop.f32.mrf.mxu0
    %v465 = vadd.f32 0.0, %v464
    %v466 = vpop.f32.mrf.mxu0
    %v467 = vadd.f32 0.0, %v466
    %468 = vmatmul.bf16.gmra.mxu0 %v368
    %v469 = vpop.f32.mrf.mxu0
    %v470 = vadd.f32 0.0, %v469
    %v471 = vpop.f32.mrf.mxu0
    %v472 = vadd.f32 0.0, %v471
    %473 = vmatmul.bf16.gmra.mxu0 %v369
    %v474 = vpop.f32.mrf.mxu0
    %v475 = vadd.f32 0.0, %v474
    %v476 = vpop.f32.mrf.mxu0
    %v477 = vadd.f32 0.0, %v476
    %478 = vmatmul.bf16.gmra.mxu0 %v370
    %v479 = vpop.f32.mrf.mxu0
    %v480 = vadd.f32 0.0, %v479
    %v481 = vpop.f32.mrf.mxu0
    %v482 = vadd.f32 0.0, %v481
    %483 = vdwg.mxu0
    %v484 = vpack.c.bf16 %v447, %v445
    %v485 = vpack.c.bf16 %v452, %v450
    %v486 = vpack.c.bf16 %v457, %v455
    %v487 = vpack.c.bf16 %v462, %v460
    %v488 = vpack.c.bf16 %v467, %v465
    %v489 = vpack.c.bf16 %v472, %v470
    %v490 = vpack.c.bf16 %v477, %v475
    %v491 = vpack.c.bf16 %v482, %v480
    %v492 = vld [vmem:[%s5] sm:$0x1]
    %v494 = vperm.slane %v492, 0
    %496 = vmatpush.bf16.msra.mxu0 %v491
    %497 = vmatpush.bf16.msra.mxu0 %v490
    %498 = vmatpush.bf16.msra.mxu0 %v489
    %499 = vmatpush.bf16.msra.mxu0 %v488
    %500 = vmatpush.bf16.msra.mxu0 %v487
    %501 = vmatpush.bf16.msra.mxu0 %v486
    %502 = vmatpush.bf16.msra.mxu0 %v485
    %503 = vmatpush.bf16.msra.mxu0 %v484
    %504 = vmatmul.bf16.gmra.mxu0 %v282
    %v505 = vpop.f32.mrf.mxu0
    %v506 = vadd.f32 %v494, %v505
    %v507 = vpop.f32.mrf.mxu0
    %v508 = vadd.f32 %v494, %v507
    %509 = vmatmul.bf16.gmra.mxu0 %v283
    %v510 = vpop.f32.mrf.mxu0
    %v511 = vadd.f32 %v494, %v510
    %v512 = vpop.f32.mrf.mxu0
    %v513 = vadd.f32 %v494, %v512
    %514 = vmatmul.bf16.gmra.mxu0 %v284
    %v515 = vpop.f32.mrf.mxu0
    %v516 = vadd.f32 %v494, %v515
    %v517 = vpop.f32.mrf.mxu0
    %v518 = vadd.f32 %v494, %v517
    %519 = vmatmul.bf16.gmra.mxu0 %v285
    %v520 = vpop.f32.mrf.mxu0
    %v521 = vadd.f32 %v494, %v520
    %v522 = vpop.f32.mrf.mxu0
    %v523 = vadd.f32 %v494, %v522
    %524 = vmatmul.bf16.gmra.mxu0 %v286
    %v525 = vpop.f32.mrf.mxu0
    %v526 = vadd.f32 %v494, %v525
    %v527 = vpop.f32.mrf.mxu0
    %v528 = vadd.f32 %v494, %v527
    %529 = vmatmul.bf16.gmra.mxu0 %v287
    %v530 = vpop.f32.mrf.mxu0
    %v531 = vadd.f32 %v494, %v530
    %v532 = vpop.f32.mrf.mxu0
    %v533 = vadd.f32 %v494, %v532
    %534 = vmatmul.bf16.gmra.mxu0 %v288
    %v535 = vpop.f32.mrf.mxu0
    %v536 = vadd.f32 %v494, %v535
    %v537 = vpop.f32.mrf.mxu0
    %v538 = vadd.f32 %v494, %v537
    %539 = vmatmul.bf16.gmra.mxu0 %v289
    %v540 = vpop.f32.mrf.mxu0
    %v541 = vadd.f32 %v494, %v540
    %v542 = vpop.f32.mrf.mxu0
    %v543 = vadd.f32 %v494, %v542
    %544 = vdwg.mxu0
    %v545 = vmax.f32 %v506, 0.0
    %v546 = vmax.f32 %v508, 0.0
    %v547 = vmax.f32 %v511, 0.0
    %v548 = vmax.f32 %v513, 0.0
    %v549 = vmax.f32 %v516, 0.0
    %v550 = vmax.f32 %v518, 0.0
    %v551 = vmax.f32 %v521, 0.0
    %v552 = vmax.f32 %v523, 0.0
    %v553 = vmax.f32 %v526, 0.0
    %v554 = vmax.f32 %v528, 0.0
    %v555 = vmax.f32 %v531, 0.0
    %v556 = vmax.f32 %v533, 0.0
    %v557 = vmax.f32 %v536, 0.0
    %v558 = vmax.f32 %v538, 0.0
    %v559 = vmax.f32 %v541, 0.0
    %v560 = vmax.f32 %v543, 0.0
    %v561 = vpack.c.bf16 %v546, %v545
    %v562 = vpack.c.bf16 %v548, %v547
    %v563 = vpack.c.bf16 %v550, %v549
    %v564 = vpack.c.bf16 %v552, %v551
    %v565 = vpack.c.bf16 %v554, %v553
    %v566 = vpack.c.bf16 %v556, %v555
    %v567 = vpack.c.bf16 %v558, %v557
    %v568 = vpack.c.bf16 %v560, %v559
    %v569 = vld [vmem:[#allocation2] sm:$0xf]
    %v570 = vld [vmem:[#allocation2 + $0x4] sm:$0xf]
    %v571 = vld [vmem:[#allocation2 + $0x8] sm:$0xf]
    %v572 = vld [vmem:[#allocation2 + $0xc] sm:$0xf]
    %v573 = vld [vmem:[#allocation2 + $0x10] sm:$0xf]
    %v574 = vld [vmem:[#allocation2 + $0x14] sm:$0xf]
    %v575 = vld [vmem:[#allocation2 + $0x18] sm:$0xf]
    %v576 = vld [vmem:[#allocation2 + $0x1c] sm:$0xf]
    %v577 = vld [vmem:[#allocation2 + $0x20] sm:$0xf]
    %v578 = vld [vmem:[#allocation2 + $0x24] sm:$0xf]
    %v579 = vld [vmem:[#allocation2 + $0x28] sm:$0xf]
    %v580 = vld [vmem:[#allocation2 + $0x2c] sm:$0xf]
    %v581 = vld [vmem:[#allocation2 + $0x30] sm:$0xf]
    %v582 = vld [vmem:[#allocation2 + $0x34] sm:$0xf]
    %v583 = vld [vmem:[#allocation2 + $0x38] sm:$0xf]
    %v584 = vld [vmem:[#allocation2 + $0x3c] sm:$0xf]
    %v601 = vunpack.c.l.b16 %v569
    %v602 = vunpack.c.l.b16 %v570
    %v603 = vunpack.c.l.b16 %v571
    %v604 = vunpack.c.l.b16 %v572
    %v605 = vunpack.c.l.b16 %v573
    %v606 = vunpack.c.l.b16 %v574
    %v607 = vunpack.c.l.b16 %v575
    %v608 = vunpack.c.l.b16 %v576
    %v609 = vunpack.c.l.b16 %v577
    %v610 = vunpack.c.l.b16 %v578
    %v611 = vunpack.c.l.b16 %v579
    %v612 = vunpack.c.l.b16 %v580
    %v613 = vunpack.c.l.b16 %v581
    %v614 = vunpack.c.l.b16 %v582
    %v615 = vunpack.c.l.b16 %v583
    %v616 = vunpack.c.l.b16 %v584
    %v617 = vpack.c.b16 %v602, %v601
    %v618 = vpack.c.b16 %v604, %v603
    %v619 = vpack.c.b16 %v606, %v605
    %v620 = vpack.c.b16 %v608, %v607
    %v621 = vpack.c.b16 %v610, %v609
    %v622 = vpack.c.b16 %v612, %v611
    %v623 = vpack.c.b16 %v614, %v613
    %v624 = vpack.c.b16 %v616, %v615
    %633 = vmatpush.bf16.msra.mxu0 %v624
    %634 = vmatpush.bf16.msra.mxu0 %v623
    %635 = vmatpush.bf16.msra.mxu0 %v622
    %636 = vmatpush.bf16.msra.mxu0 %v621
    %637 = vmatpush.bf16.msra.mxu0 %v620
    %638 = vmatpush.bf16.msra.mxu0 %v619
    %639 = vmatpush.bf16.msra.mxu0 %v618
    %640 = vmatpush.bf16.msra.mxu0 %v617
    %641 = vmatmul.bf16.gmra.mxu0 %v561
    %v642 = vpop.f32.mrf.mxu0
    %v643 = vadd.f32 0.0, %v642
    %v644 = vpop.f32.mrf.mxu0
    %v645 = vadd.f32 0.0, %v644
    %646 = vmatmul.bf16.gmra.mxu0 %v562
    %v647 = vpop.f32.mrf.mxu0
    %v648 = vadd.f32 0.0, %v647
    %v649 = vpop.f32.mrf.mxu0
    %v650 = vadd.f32 0.0, %v649
    %651 = vmatmul.bf16.gmra.mxu0 %v563
    %v652 = vpop.f32.mrf.mxu0
    %v653 = vadd.f32 0.0, %v652
    %v654 = vpop.f32.mrf.mxu0
    %v655 = vadd.f32 0.0, %v654
    %656 = vmatmul.bf16.gmra.mxu0 %v564
    %v657 = vpop.f32.mrf.mxu0
    %v658 = vadd.f32 0.0, %v657
    %v659 = vpop.f32.mrf.mxu0
    %v660 = vadd.f32 0.0, %v659
    %661 = vmatmul.bf16.gmra.mxu0 %v565
    %v662 = vpop.f32.mrf.mxu0
    %v663 = vadd.f32 0.0, %v662
    %v664 = vpop.f32.mrf.mxu0
    %v665 = vadd.f32 0.0, %v664
    %666 = vmatmul.bf16.gmra.mxu0 %v566
    %v667 = vpop.f32.mrf.mxu0
    %v668 = vadd.f32 0.0, %v667
    %v669 = vpop.f32.mrf.mxu0
    %v670 = vadd.f32 0.0, %v669
    %671 = vmatmul.bf16.gmra.mxu0 %v567
    %v672 = vpop.f32.mrf.mxu0
    %v673 = vadd.f32 0.0, %v672
    %v674 = vpop.f32.mrf.mxu0
    %v675 = vadd.f32 0.0, %v674
    %676 = vmatmul.bf16.gmra.mxu0 %v568
    %v677 = vpop.f32.mrf.mxu0
    %v678 = vadd.f32 0.0, %v677
    %v679 = vpop.f32.mrf.mxu0
    %v680 = vadd.f32 0.0, %v679
    %681 = vdwg.mxu0
    %v682 = vpack.c.bf16 %v645, %v643
    %v683 = vpack.c.bf16 %v650, %v648
    %v684 = vpack.c.bf16 %v655, %v653
    %v685 = vpack.c.bf16 %v660, %v658
    %v686 = vpack.c.bf16 %v665, %v663
    %v687 = vpack.c.bf16 %v670, %v668
    %v688 = vpack.c.bf16 %v675, %v673
    %v689 = vpack.c.bf16 %v680, %v678
    %v690 = vld [vmem:[%s7] sm:$0x1]
    %v692 = vperm.slane %v690, 0
    %694 = vmatpush.bf16.msra.mxu0 %v689
    %695 = vmatpush.bf16.msra.mxu0 %v688
    %696 = vmatpush.bf16.msra.mxu0 %v687
    %697 = vmatpush.bf16.msra.mxu0 %v686
    %698 = vmatpush.bf16.msra.mxu0 %v685
    %699 = vmatpush.bf16.msra.mxu0 %v684
    %700 = vmatpush.bf16.msra.mxu0 %v683
    %701 = vmatpush.bf16.msra.mxu0 %v682
    %702 = vmatmul.bf16.gmra.mxu0 %v282
    %v703 = vpop.f32.mrf.mxu0
    %v704 = vadd.f32 %v692, %v703
    %v705 = vpop.f32.mrf.mxu0
    %v706 = vadd.f32 %v692, %v705
    %707 = vmatmul.bf16.gmra.mxu0 %v283
    %v708 = vpop.f32.mrf.mxu0
    %v709 = vadd.f32 %v692, %v708
    %v710 = vpop.f32.mrf.mxu0
    %v711 = vadd.f32 %v692, %v710
    %712 = vmatmul.bf16.gmra.mxu0 %v284
    %v713 = vpop.f32.mrf.mxu0
    %v714 = vadd.f32 %v692, %v713
    %v715 = vpop.f32.mrf.mxu0
    %v716 = vadd.f32 %v692, %v715
    %717 = vmatmul.bf16.gmra.mxu0 %v285
    %v718 = vpop.f32.mrf.mxu0
    %v719 = vadd.f32 %v692, %v718
    %v720 = vpop.f32.mrf.mxu0
    %v721 = vadd.f32 %v692, %v720
    %722 = vmatmul.bf16.gmra.mxu0 %v286
    %v723 = vpop.f32.mrf.mxu0
    %v724 = vadd.f32 %v692, %v723
    %v725 = vpop.f32.mrf.mxu0
    %v726 = vadd.f32 %v692, %v725
    %727 = vmatmul.bf16.gmra.mxu0 %v287
    %v728 = vpop.f32.mrf.mxu0
    %v729 = vadd.f32 %v692, %v728
    %v730 = vpop.f32.mrf.mxu0
    %v731 = vadd.f32 %v692, %v730
    %732 = vmatmul.bf16.gmra.mxu0 %v288
    %v733 = vpop.f32.mrf.mxu0
    %v734 = vadd.f32 %v692, %v733
    %v735 = vpop.f32.mrf.mxu0
    %v736 = vadd.f32 %v692, %v735
    %737 = vmatmul.bf16.gmra.mxu0 %v289
    %v738 = vpop.f32.mrf.mxu0
    %v739 = vadd.f32 %v692, %v738
    %v740 = vpop.f32.mrf.mxu0
    %v741 = vadd.f32 %v692, %v740
    %742 = vdwg.mxu0
    %v743 = vlaneseq
    %v744 = vand.u32 %v743, 127
    %vm745 = vcmp.lt.s32.totalorder %v744, 2
    %v746 = vsel %vm745, %v704, -inf
    %v747 = vsel %vm745, %v706, -inf
    %v748 = vsel %vm745, %v709, -inf
    %v749 = vsel %vm745, %v711, -inf
    %v750 = vsel %vm745, %v714, -inf
    %v751 = vsel %vm745, %v716, -inf
    %v752 = vsel %vm745, %v719, -inf
    %v753 = vsel %vm745, %v721, -inf
    %v754 = vsel %vm745, %v724, -inf
    %v755 = vsel %vm745, %v726, -inf
    %v756 = vsel %vm745, %v729, -inf
    %v757 = vsel %vm745, %v731, -inf
    %v758 = vsel %vm745, %v734, -inf
    %v759 = vsel %vm745, %v736, -inf
    %v760 = vsel %vm745, %v739, -inf
    %v761 = vsel %vm745, %v741, -inf
    %762 = vmax.xlane.f32.xlu0 %v746
    %v763 = vpop.xlane.xlu0 %762
    %764 = vmax.xlane.f32.xlu0 %v747
    %v765 = vpop.xlane.xlu0 %764
    %766 = vmax.xlane.f32.xlu0 %v748
    %v767 = vpop.xlane.xlu0 %766
    %768 = vmax.xlane.f32.xlu0 %v749
    %v769 = vpop.xlane.xlu0 %768
    %770 = vmax.xlane.f32.xlu0 %v750
    %v771 = vpop.xlane.xlu0 %770
    %772 = vmax.xlane.f32.xlu0 %v751
    %v773 = vpop.xlane.xlu0 %772
    %774 = vmax.xlane.f32.xlu0 %v752
    %v775 = vpop.xlane.xlu0 %774
    %776 = vmax.xlane.f32.xlu0 %v753
    %v777 = vpop.xlane.xlu0 %776
    %778 = vmax.xlane.f32.xlu0 %v754
    %v779 = vpop.xlane.xlu0 %778
    %780 = vmax.xlane.f32.xlu0 %v755
    %v781 = vpop.xlane.xlu0 %780
    %782 = vmax.xlane.f32.xlu0 %v756
    %v783 = vpop.xlane.xlu0 %782
    %784 = vmax.xlane.f32.xlu0 %v757
    %v785 = vpop.xlane.xlu0 %784
    %786 = vmax.xlane.f32.xlu0 %v758
    %v787 = vpop.xlane.xlu0 %786
    %788 = vmax.xlane.f32.xlu0 %v759
    %v789 = vpop.xlane.xlu0 %788
    %790 = vmax.xlane.f32.xlu0 %v760
    %v791 = vpop.xlane.xlu0 %790
    %792 = vmax.xlane.f32.xlu0 %v761
    %v793 = vpop.xlane.xlu0 %792
    %v794 = vsub.f32 %v746, %v763
    %v795 = vsub.f32 %v747, %v765
    %v796 = vsub.f32 %v748, %v767
    %v797 = vsub.f32 %v749, %v769
    %v798 = vsub.f32 %v750, %v771
    %v799 = vsub.f32 %v751, %v773
    %v800 = vsub.f32 %v752, %v775
    %v801 = vsub.f32 %v753, %v777
    %v802 = vsub.f32 %v754, %v779
    %v803 = vsub.f32 %v755, %v781
    %v804 = vsub.f32 %v756, %v783
    %v805 = vsub.f32 %v757, %v785
    %v806 = vsub.f32 %v758, %v787
    %v807 = vsub.f32 %v759, %v789
    %v808 = vsub.f32 %v760, %v791
    %v809 = vsub.f32 %v761, %v793
    %v810 = vmul.f32 %v794, 1.442695
    %v811 = vpow.pop %v810
    %v812 = vmul.f32 %v795, 1.442695
    %v813 = vpow.pop %v812
    %v814 = vmul.f32 %v796, 1.442695
    %v815 = vpow.pop %v814
    %v816 = vmul.f32 %v797, 1.442695
    %v817 = vpow.pop %v816
    %v818 = vmul.f32 %v798, 1.442695
    %v819 = vpow.pop %v818
    %v820 = vmul.f32 %v799, 1.442695
    %v821 = vpow.pop %v820
    %v822 = vmul.f32 %v800, 1.442695
    %v823 = vpow.pop %v822
    %v824 = vmul.f32 %v801, 1.442695
    %v825 = vpow.pop %v824
    %v826 = vmul.f32 %v802, 1.442695
    %v827 = vpow.pop %v826
    %v828 = vmul.f32 %v803, 1.442695
    %v829 = vpow.pop %v828
    %v830 = vmul.f32 %v804, 1.442695
    %v831 = vpow.pop %v830
    %v832 = vmul.f32 %v805, 1.442695
    %v833 = vpow.pop %v832
    %v834 = vmul.f32 %v806, 1.442695
    %v835 = vpow.pop %v834
    %v836 = vmul.f32 %v807, 1.442695
    %v837 = vpow.pop %v836
    %v838 = vmul.f32 %v808, 1.442695
    %v839 = vpow.pop %v838
    %v840 = vmul.f32 %v809, 1.442695
    %v841 = vpow.pop %v840
    %842 = vadd.xlane.f32.xlu0 %v811
    %v843 = vpop.xlane.xlu0 %842
    %844 = vadd.xlane.f32.xlu0 %v813
    %v845 = vpop.xlane.xlu0 %844
    %846 = vadd.xlane.f32.xlu0 %v815
    %v847 = vpop.xlane.xlu0 %846
    %848 = vadd.xlane.f32.xlu0 %v817
    %v849 = vpop.xlane.xlu0 %848
    %850 = vadd.xlane.f32.xlu0 %v819
    %v851 = vpop.xlane.xlu0 %850
    %852 = vadd.xlane.f32.xlu0 %v821
    %v853 = vpop.xlane.xlu0 %852
    %854 = vadd.xlane.f32.xlu0 %v823
    %v855 = vpop.xlane.xlu0 %854
    %856 = vadd.xlane.f32.xlu0 %v825
    %v857 = vpop.xlane.xlu0 %856
    %858 = vadd.xlane.f32.xlu0 %v827
    %v859 = vpop.xlane.xlu0 %858
    %860 = vadd.xlane.f32.xlu0 %v829
    %v861 = vpop.xlane.xlu0 %860
    %862 = vadd.xlane.f32.xlu0 %v831
    %v863 = vpop.xlane.xlu0 %862
    %864 = vadd.xlane.f32.xlu0 %v833
    %v865 = vpop.xlane.xlu0 %864
    %866 = vadd.xlane.f32.xlu0 %v835
    %v867 = vpop.xlane.xlu0 %866
    %868 = vadd.xlane.f32.xlu0 %v837
    %v869 = vpop.xlane.xlu0 %868
    %870 = vadd.xlane.f32.xlu0 %v839
    %v871 = vpop.xlane.xlu0 %870
    %872 = vadd.xlane.f32.xlu0 %v841
    %v873 = vpop.xlane.xlu0 %872
    %v874 = vlog2.pop %v843
    %v875 = vmul.f32 %v874, 0.6931472
    %v876 = vlog2.pop %v845
    %v877 = vmul.f32 %v876, 0.6931472
    %v878 = vlog2.pop %v847
    %v879 = vmul.f32 %v878, 0.6931472
    %v880 = vlog2.pop %v849
    %v881 = vmul.f32 %v880, 0.6931472
    %v882 = vlog2.pop %v851
    %v883 = vmul.f32 %v882, 0.6931472
    %v884 = vlog2.pop %v853
    %v885 = vmul.f32 %v884, 0.6931472
    %v886 = vlog2.pop %v855
    %v887 = vmul.f32 %v886, 0.6931472
    %v888 = vlog2.pop %v857
    %v889 = vmul.f32 %v888, 0.6931472
    %v890 = vlog2.pop %v859
    %v891 = vmul.f32 %v890, 0.6931472
    %v892 = vlog2.pop %v861
    %v893 = vmul.f32 %v892, 0.6931472
    %v894 = vlog2.pop %v863
    %v895 = vmul.f32 %v894, 0.6931472
    %v896 = vlog2.pop %v865
    %v897 = vmul.f32 %v896, 0.6931472
    %v898 = vlog2.pop %v867
    %v899 = vmul.f32 %v898, 0.6931472
    %v900 = vlog2.pop %v869
    %v901 = vmul.f32 %v900, 0.6931472
    %v902 = vlog2.pop %v871
    %v903 = vmul.f32 %v902, 0.6931472
    %v904 = vlog2.pop %v873
    %v905 = vmul.f32 %v904, 0.6931472
    %v906 = vsub.f32 %v794, %v875
    %v907 = vsub.f32 %v795, %v877
    %v908 = vsub.f32 %v796, %v879
    %v909 = vsub.f32 %v797, %v881
    %v910 = vsub.f32 %v798, %v883
    %v911 = vsub.f32 %v799, %v885
    %v912 = vsub.f32 %v800, %v887
    %v913 = vsub.f32 %v801, %v889
    %v914 = vsub.f32 %v802, %v891
    %v915 = vsub.f32 %v803, %v893
    %v916 = vsub.f32 %v804, %v895
    %v917 = vsub.f32 %v805, %v897
    %v918 = vsub.f32 %v806, %v899
    %v919 = vsub.f32 %v807, %v901
    %v920 = vsub.f32 %v808, %v903
    %v921 = vsub.f32 %v809, %v905
    %922 = vst [vmem:[%s8] sm:$0xff] %v906
    %923 = vst [vmem:[%s8 + $0x8] sm:$0xff] %v907
    %924 = vst [vmem:[%s8 + $0x10] sm:$0xff] %v908
    %925 = vst [vmem:[%s8 + $0x18] sm:$0xff] %v909
    %926 = vst [vmem:[%s8 + $0x20] sm:$0xff] %v910
    %927 = vst [vmem:[%s8 + $0x28] sm:$0xff] %v911
    %928 = vst [vmem:[%s8 + $0x30] sm:$0xff] %v912
    %929 = vst [vmem:[%s8 + $0x38] sm:$0xff] %v913
    %930 = vst [vmem:[%s8 + $0x40] sm:$0xff] %v914
    %931 = vst [vmem:[%s8 + $0x48] sm:$0xff] %v915
    %932 = vst [vmem:[%s8 + $0x50] sm:$0xff] %v916
    %933 = vst [vmem:[%s8 + $0x58] sm:$0xff] %v917
    %934 = vst [vmem:[%s8 + $0x60] sm:$0xff] %v918
    %935 = vst [vmem:[%s8 + $0x68] sm:$0xff] %v919
    %936 = vst [vmem:[%s8 + $0x70] sm:$0xff] %v920
    %937 = vst [vmem:[%s8 + $0x78] sm:$0xff] %v921
    // Predicated region
    $region38: #{gcn_forward_fused.1} parent=1 // pred_check
      _
    $region39: #{gcn_forward_fused.1} parent=1 // pred_check_branch
      %939 = sbr.rel (0) target = $region41
    $region40: #{gcn_forward_fused.1} parent=1 // pred_region
      _
    $region41: #{gcn_forward_fused.1} parent=1 // pred_fallthru
      _
    // Predicated region
    $region42: #{gcn_forward_fused.1} parent=1 // pred_check
      _
    $region43: #{gcn_forward_fused.1} parent=1 // pred_check_branch
      %941 = sbr.rel (0) target = $region45
    $region44: #{gcn_forward_fused.1} parent=1 // pred_region
      _
    $region45: #{gcn_forward_fused.1} parent=1 // pred_fallthru
      _
    %942 = vsyncpa [#allocation3], 1

</llo_original>
